<compile_context>
chip_gen: v5e
topology: v5e:2x2
jax: 0.10.0
libtpu: 0.0.40
codegen_flags: <defaults>
</compile_context>

<pallas_src>
import functools

import jax
import jax.numpy as jnp
from jax.experimental import pallas as pl
from jax.experimental.pallas import tpu as pltpu


def _round_up(x, m):
    return ((x + m - 1) // m) * m


def textcnn_kernel(raw_ref, pool_ref, cw_ref, cb_ref, bns_ref, bnb_ref,
                   w1_ref, b1_ref, w2_ref, b2_ref,
                   feat_ref, avg_ref, bn_ref, fc1_ref, out_ref):
    # Conv1d(kernel=D, stride=D) over the (1, L*D) signal == per-token matmul on the MXU.
    # raw tile: (TB*L, D) bf16; weights: (D, FP) bf16; accumulate in f32.
    feat = jnp.dot(raw_ref[...], cw_ref[...],
                   preferred_element_type=jnp.float32) + cb_ref[...]
    feat = jnp.maximum(feat, 0.0)                                  # (TB*L, FP) f32

    # x_feat.permute(0, 2, 1) rows; stored at natural (compact) lane width in HBM.
    feat_ref[...] = feat[:, :feat_ref.shape[1]]

    # avg_pool1d over the full time axis: segmented mean via a constant pooling matmul
    # (keeps the reduction on the MXU with no in-kernel reshape / relayout).
    avg = jnp.dot(pool_ref[...], feat, preferred_element_type=jnp.float32)  # (TB, FP)
    avg_ref[...] = avg

    # eval-mode BatchNorm1d folded into per-feature scale/shift.
    bn = avg * bns_ref[...] + bnb_ref[...]
    bn_ref[...] = bn

    # dropout (eval) == identity.
    fc1 = jnp.dot(bn, w1_ref[...], preferred_element_type=jnp.float32) + b1_ref[...]
    fc1_ref[...] = fc1

    out_ref[...] = (jnp.dot(fc1, w2_ref[...], preferred_element_type=jnp.float32)
                    + b2_ref[...])


def textcnn_forward(word_idx, params, *, max_len, word_dim, filter_num, num_classes,
                    block_batch=None):
    B, L = word_idx.shape
    D, F, C = word_dim, filter_num, num_classes

    # Embedding gather stays in XLA glue: raw_feature is a returned module output, so it
    # must be materialized in HBM regardless (see TODO(synk) in the header).
    raw_feature = params["embedding"][word_idx]                    # (B, L, D) f32

    # Batch tile: multiple of 8 so every output block is sublane-tile aligned.
    if block_batch is None:
        block_batch = max(1, 512 // max(L, 1))                     # ~512 token rows / tile
    TB = _round_up(max(1, min(block_batch, B)), 8)
    BP = _round_up(B, TB)
    FP = _round_up(F, 128)                                         # lane-dense widths
    CP = _round_up(C, 128)
    rows = TB * L

    # (B, L, D) -> (B*L, D) at the XLA boundary + bf16 for the dominant HBM stream.
    raw2 = raw_feature.reshape(B * L, D).astype(jnp.bfloat16)
    if BP != B:
        raw2 = jnp.pad(raw2, ((0, (BP - B) * L), (0, 0)))

    eps = 1e-5
    bn_scale = params["bn_gamma"] / jnp.sqrt(params["bn_var"] + eps)
    bn_shift = params["bn_beta"] - params["bn_mean"] * bn_scale

    def pad_to(x, shape):
        return jnp.pad(x, [(0, s - d) for s, d in zip(shape, x.shape)])

    conv_w = pad_to(params["conv_w"].reshape(F, D).T.astype(jnp.bfloat16), (D, FP))
    conv_b = pad_to(params["conv_b"].reshape(1, F), (1, FP))
    bns = pad_to(bn_scale.reshape(1, F), (1, FP))
    bnb = pad_to(bn_shift.reshape(1, F), (1, FP))
    w1 = pad_to(params["fc1_w"].T, (FP, FP))
    b1 = pad_to(params["fc1_b"].reshape(1, F), (1, FP))
    w2 = pad_to(params["fc2_w"].T, (FP, CP))
    b2 = pad_to(params["fc2_b"].reshape(1, C), (1, CP))

    # Constant pooling matrix: pool[b, r] = 1/L if token-row r belongs to batch row b.
    pool = ((jnp.arange(rows) // L) == jnp.arange(TB)[:, None]).astype(jnp.float32) / L

    rep = lambda i: (0, 0)   # resident (loop-invariant) blocks
    tile = lambda i: (i, 0)  # streamed per-batch-tile blocks

    in_specs = [
        pl.BlockSpec((rows, D), tile),    # raw token rows (dominant stream, pipelined)
        pl.BlockSpec((TB, rows), rep),    # pooling matrix
        pl.BlockSpec((D, FP), rep),       # conv weight
        pl.BlockSpec((1, FP), rep),       # conv bias
        pl.BlockSpec((1, FP), rep),       # bn scale
        pl.BlockSpec((1, FP), rep),       # bn shift
        pl.BlockSpec((FP, FP), rep),      # fc1 weight
        pl.BlockSpec((1, FP), rep),       # fc1 bias
        pl.BlockSpec((FP, CP), rep),      # fc2 weight
        pl.BlockSpec((1, CP), rep),       # fc2 bias
    ]
    out_specs = (
        pl.BlockSpec((rows, F), tile),    # feat (compact lane width in HBM)
        pl.BlockSpec((TB, FP), tile),     # avg   (lane-dense)
        pl.BlockSpec((TB, FP), tile),     # bn    (lane-dense)
        pl.BlockSpec((TB, FP), tile),     # fc1   (lane-dense)
        pl.BlockSpec((TB, CP), tile),     # final (lane-dense)
    )
    out_shapes = (
        jax.ShapeDtypeStruct((BP * L, F), jnp.float32),
        jax.ShapeDtypeStruct((BP, FP), jnp.float32),
        jax.ShapeDtypeStruct((BP, FP), jnp.float32),
        jax.ShapeDtypeStruct((BP, FP), jnp.float32),
        jax.ShapeDtypeStruct((BP, CP), jnp.float32),
    )

    feat2, avg_p, bn_p, fc1_p, out_p = pl.pallas_call(
        textcnn_kernel,
        grid=(BP // TB,),
        in_specs=in_specs,
        out_specs=out_specs,
        out_shape=out_shapes,
        compiler_params=pltpu.CompilerParams(
            dimension_semantics=("parallel",),        # shard batch tiles across TCs (v7x)
            vmem_limit_bytes=32 * 1024 * 1024,        # explicit; tiles are far below this,
        ),                                            # safe for v7x's 64 MiB VMEM too
    )(raw2, pool, conv_w, conv_b, bns, bnb, w1, b1, w2, b2)

    # Strip batch / lane padding; same return ordering as the PyTorch module.
    x_feat = feat2[:B * L].reshape(B, L, F)           # x_feat.permute(0, 2, 1)
    x_avg = avg_p[:B, :F]
    x_avg_bn = bn_p[:B, :F]
    x_fc1 = fc1_p[:B, :F]
    x_final = out_p[:B, :C]
    return x_final, x_fc1, x_avg_bn, x_avg, x_feat, raw_feature


def reference_forward(word_idx, params, *, max_len, word_dim, filter_num, num_classes):
    raw = params["embedding"][word_idx]
    wc = params["conv_w"].reshape(filter_num, word_dim)
    feat = jnp.maximum(jnp.einsum("bld,fd->blf", raw, wc) + params["conv_b"], 0.0)
    avg = jnp.mean(feat, axis=1)
    bn = ((avg - params["bn_mean"]) / jnp.sqrt(params["bn_var"] + 1e-5)
          * params["bn_gamma"] + params["bn_beta"])
    fc1 = bn @ params["fc1_w"].T + params["fc1_b"]
    final = fc1 @ params["fc2_w"].T + params["fc2_b"]
    return final, fc1, bn, avg, feat, raw


def init_params(key, *, vocab_size, word_dim, filter_num, num_classes):
    ks = jax.random.split(key, 9)
    emb = jax.random.normal(ks[0], (vocab_size + 2, word_dim), jnp.float32) * 0.1
    emb = emb.at[vocab_size + 1].set(0.0)    # padding_idx = vocab_size + 1
    return {
        "embedding": emb,
        "conv_w": jax.random.normal(ks[1], (filter_num, 1, word_dim), jnp.float32) * 0.1,
        "conv_b": jax.random.normal(ks[2], (filter_num,), jnp.float32) * 0.1,
        "bn_gamma": jnp.ones((filter_num,), jnp.float32)
                    + jax.random.normal(ks[3], (filter_num,), jnp.float32) * 0.05,
        "bn_beta": jax.random.normal(ks[4], (filter_num,), jnp.float32) * 0.05,
        "bn_mean": jax.random.normal(ks[5], (filter_num,), jnp.float32) * 0.05,
        "bn_var": jnp.abs(jax.random.normal(ks[6], (filter_num,), jnp.float32)) * 0.5 + 0.5,
        "fc1_w": jax.random.normal(ks[7], (filter_num, filter_num), jnp.float32) * 0.1,
        "fc1_b": jnp.zeros((filter_num,), jnp.float32),
        "fc2_w": jax.random.normal(ks[8], (num_classes, filter_num), jnp.float32) * 0.1,
        "fc2_b": jnp.zeros((num_classes,), jnp.float32),
    }


if __name__ == "__main__":
    # args: vocab_size=20, word_dim=32, max_len=8, in_channel=1,
    #       filter_num=16, num_classes=4, dropout inactive (eval mode)
    vocab_size, word_dim, max_len, filter_num, num_classes = 20, 32, 8, 16, 4
    batch = 16          # block_batch=8 below -> 2-step grid, exercises the pipeline

    key = jax.random.PRNGKey(0)
    pkey, ikey = jax.random.split(key)
    params = init_params(pkey, vocab_size=vocab_size, word_dim=word_dim,
                         filter_num=filter_num, num_classes=num_classes)

    # word indices in [0, vocab_size+1]; force one padding token to exercise padding_idx
    word_idx = jax.random.randint(ikey, (batch, max_len), 0, vocab_size + 1, jnp.int32)
    word_idx = word_idx.at[0, -1].set(vocab_size + 1)

    fwd = jax.jit(functools.partial(textcnn_forward, max_len=max_len, word_dim=word_dim,
                                    filter_num=filter_num, num_classes=num_classes,
                                    block_batch=8))
    outs = fwd(word_idx, params)
    outs = jax.block_until_ready(outs)

    refs = reference_forward(word_idx, params, max_len=max_len, word_dim=word_dim,
                             filter_num=filter_num, num_classes=num_classes)
    for o, r in zip(outs, refs):
        assert o.shape == r.shape, (o.shape, r.shape)
        assert jnp.allclose(o, r, rtol=2e-2, atol=2e-2), float(jnp.max(jnp.abs(o - r)))

    print("KERNEL_OK")
</pallas_src>

<mosaic_0001>
module attributes {stable_mosaic.version = 11 : i64} {
  func.func @textcnn_kernel(%arg0: i32, %arg1: memref<64x32xbf16, #tpu.memory_space<vmem>>, %arg2: memref<8x64xf32, #tpu.memory_space<vmem>>, %arg3: memref<32x128xbf16, #tpu.memory_space<vmem>>, %arg4: memref<1x128xf32, #tpu.memory_space<vmem>>, %arg5: memref<1x128xf32, #tpu.memory_space<vmem>>, %arg6: memref<1x128xf32, #tpu.memory_space<vmem>>, %arg7: memref<128x128xf32, #tpu.memory_space<vmem>>, %arg8: memref<1x128xf32, #tpu.memory_space<vmem>>, %arg9: memref<128x128xf32, #tpu.memory_space<vmem>>, %arg10: memref<1x128xf32, #tpu.memory_space<vmem>>, %arg11: memref<64x16xf32, #tpu.memory_space<vmem>>, %arg12: memref<8x128xf32, #tpu.memory_space<vmem>>, %arg13: memref<8x128xf32, #tpu.memory_space<vmem>>, %arg14: memref<8x128xf32, #tpu.memory_space<vmem>>, %arg15: memref<8x128xf32, #tpu.memory_space<vmem>>) attributes {dimension_semantics = [#tpu.dimension_semantics<parallel>], iteration_bounds = array<i64: 2>, scalar_prefetch = 0 : i64, scratch_operands = 0 : i64, tpu.core_type = #tpu.core_type<tc>, window_params = [{transform_indices = @transform_0, window_bounds = array<i64: 64, 32>}, {pipeline_mode = #tpu.pipeline_mode<synchronous>, transform_indices = @transform_1, window_bounds = array<i64: 8, 64>}, {pipeline_mode = #tpu.pipeline_mode<synchronous>, transform_indices = @transform_2, window_bounds = array<i64: 32, 128>}, {pipeline_mode = #tpu.pipeline_mode<synchronous>, transform_indices = @transform_3, window_bounds = array<i64: 1, 128>}, {pipeline_mode = #tpu.pipeline_mode<synchronous>, transform_indices = @transform_4, window_bounds = array<i64: 1, 128>}, {pipeline_mode = #tpu.pipeline_mode<synchronous>, transform_indices = @transform_5, window_bounds = array<i64: 1, 128>}, {pipeline_mode = #tpu.pipeline_mode<synchronous>, transform_indices = @transform_6, window_bounds = array<i64: 128, 128>}, {pipeline_mode = #tpu.pipeline_mode<synchronous>, transform_indices = @transform_7, window_bounds = array<i64: 1, 128>}, {pipeline_mode = #tpu.pipeline_mode<synchronous>, transform_indices = @transform_8, window_bounds = array<i64: 128, 128>}, {pipeline_mode = #tpu.pipeline_mode<synchronous>, transform_indices = @transform_9, window_bounds = array<i64: 1, 128>}, {transform_indices = @transform_10, window_bounds = array<i64: 64, 16>}, {transform_indices = @transform_11, window_bounds = array<i64: 8, 128>}, {transform_indices = @transform_12, window_bounds = array<i64: 8, 128>}, {transform_indices = @transform_13, window_bounds = array<i64: 8, 128>}, {transform_indices = @transform_14, window_bounds = array<i64: 8, 128>}]} {
    %c0 = arith.constant 0 : index
    %c0_0 = arith.constant 0 : index
    %0 = vector.load %arg1[%c0, %c0_0] : memref<64x32xbf16, #tpu.memory_space<vmem>>, vector<64x32xbf16>
    %c0_1 = arith.constant 0 : index
    %c0_2 = arith.constant 0 : index
    %1 = vector.load %arg3[%c0_1, %c0_2] : memref<32x128xbf16, #tpu.memory_space<vmem>>, vector<32x128xbf16>
    %cst = arith.constant dense<0.000000e+00> : vector<64x128xf32>
    %2 = tpu.matmul %0, %1, %cst {dimension_numbers = #tpu.dot_dimension_numbers<[1], [0], [0], [1], [0, 0, 1, 1], [], []>} : vector<64x32xbf16>, vector<32x128xbf16>, vector<64x128xf32> -> vector<64x128xf32>
    %c0_3 = arith.constant 0 : index
    %c0_4 = arith.constant 0 : index
    %3 = vector.load %arg4[%c0_3, %c0_4] : memref<1x128xf32, #tpu.memory_space<vmem>>, vector<1x128xf32>
    %4 = vector.broadcast %3 : vector<1x128xf32> to vector<64x128xf32>
    %5 = arith.addf %2, %4 : vector<64x128xf32>
    %cst_5 = arith.constant 0.000000e+00 : f32
    %6 = vector.broadcast %cst_5 : f32 to vector<64x128xf32>
    %7 = arith.maximumf %5, %6 : vector<64x128xf32>
    %8 = vector.extract_strided_slice %7 {offsets = [0, 0], sizes = [64, 16], strides = [1, 1]} : vector<64x128xf32> to vector<64x16xf32>
    %c0_6 = arith.constant 0 : index
    %c0_7 = arith.constant 0 : index
    %9 = vector.load %arg11[%c0_6, %c0_7] : memref<64x16xf32, #tpu.memory_space<vmem>>, vector<64x16xf32>
    tpu.vector_store %arg11[%c0_6, %c0_7], %8 {strides = array<i32>} : memref<64x16xf32, #tpu.memory_space<vmem>>, vector<64x16xf32>,
    %c0_8 = arith.constant 0 : index
    %c0_9 = arith.constant 0 : index
    %10 = vector.load %arg2[%c0_8, %c0_9] : memref<8x64xf32, #tpu.memory_space<vmem>>, vector<8x64xf32>
    %cst_10 = arith.constant dense<0.000000e+00> : vector<8x128xf32>
    %11 = tpu.matmul %10, %7, %cst_10 {dimension_numbers = #tpu.dot_dimension_numbers<[1], [0], [0], [1], [0, 0, 1, 1], [], []>} : vector<8x64xf32>, vector<64x128xf32>, vector<8x128xf32> -> vector<8x128xf32>
    %c0_11 = arith.constant 0 : index
    %c0_12 = arith.constant 0 : index
    %12 = vector.load %arg12[%c0_11, %c0_12] : memref<8x128xf32, #tpu.memory_space<vmem>>, vector<8x128xf32>
    tpu.vector_store %arg12[%c0_11, %c0_12], %11 {strides = array<i32>} : memref<8x128xf32, #tpu.memory_space<vmem>>, vector<8x128xf32>,
    %c0_13 = arith.constant 0 : index
    %c0_14 = arith.constant 0 : index
    %13 = vector.load %arg5[%c0_13, %c0_14] : memref<1x128xf32, #tpu.memory_space<vmem>>, vector<1x128xf32>
    %14 = vector.broadcast %13 : vector<1x128xf32> to vector<8x128xf32>
    %15 = arith.mulf %11, %14 : vector<8x128xf32>
    %c0_15 = arith.constant 0 : index
    %c0_16 = arith.constant 0 : index
    %16 = vector.load %arg6[%c0_15, %c0_16] : memref<1x128xf32, #tpu.memory_space<vmem>>, vector<1x128xf32>
    %17 = vector.broadcast %16 : vector<1x128xf32> to vector<8x128xf32>
    %18 = arith.addf %15, %17 : vector<8x128xf32>
    %c0_17 = arith.constant 0 : index
    %c0_18 = arith.constant 0 : index
    %19 = vector.load %arg13[%c0_17, %c0_18] : memref<8x128xf32, #tpu.memory_space<vmem>>, vector<8x128xf32>
    tpu.vector_store %arg13[%c0_17, %c0_18], %18 {strides = array<i32>} : memref<8x128xf32, #tpu.memory_space<vmem>>, vector<8x128xf32>,
    %c0_19 = arith.constant 0 : index
    %c0_20 = arith.constant 0 : index
    %20 = vector.load %arg7[%c0_19, %c0_20] : memref<128x128xf32, #tpu.memory_space<vmem>>, vector<128x128xf32>
    %cst_21 = arith.constant dense<0.000000e+00> : vector<8x128xf32>
    %21 = tpu.matmul %18, %20, %cst_21 {dimension_numbers = #tpu.dot_dimension_numbers<[1], [0], [0], [1], [0, 0, 1, 1], [], []>} : vector<8x128xf32>, vector<128x128xf32>, vector<8x128xf32> -> vector<8x128xf32>
    %c0_22 = arith.constant 0 : index
    %c0_23 = arith.constant 0 : index
    %22 = vector.load %arg8[%c0_22, %c0_23] : memref<1x128xf32, #tpu.memory_space<vmem>>, vector<1x128xf32>
    %23 = vector.broadcast %22 : vector<1x128xf32> to vector<8x128xf32>
    %24 = arith.addf %21, %23 : vector<8x128xf32>
    %c0_24 = arith.constant 0 : index
    %c0_25 = arith.constant 0 : index
    %25 = vector.load %arg14[%c0_24, %c0_25] : memref<8x128xf32, #tpu.memory_space<vmem>>, vector<8x128xf32>
    tpu.vector_store %arg14[%c0_24, %c0_25], %24 {strides = array<i32>} : memref<8x128xf32, #tpu.memory_space<vmem>>, vector<8x128xf32>,
    %c0_26 = arith.constant 0 : index
    %c0_27 = arith.constant 0 : index
    %26 = vector.load %arg9[%c0_26, %c0_27] : memref<128x128xf32, #tpu.memory_space<vmem>>, vector<128x128xf32>
    %cst_28 = arith.constant dense<0.000000e+00> : vector<8x128xf32>
    %27 = tpu.matmul %24, %26, %cst_28 {dimension_numbers = #tpu.dot_dimension_numbers<[1], [0], [0], [1], [0, 0, 1, 1], [], []>} : vector<8x128xf32>, vector<128x128xf32>, vector<8x128xf32> -> vector<8x128xf32>
    %c0_29 = arith.constant 0 : index
    %c0_30 = arith.constant 0 : index
    %28 = vector.load %arg10[%c0_29, %c0_30] : memref<1x128xf32, #tpu.memory_space<vmem>>, vector<1x128xf32>
    %29 = vector.broadcast %28 : vector<1x128xf32> to vector<8x128xf32>
    %30 = arith.addf %27, %29 : vector<8x128xf32>
    %c0_31 = arith.constant 0 : index
    %c0_32 = arith.constant 0 : index
    %31 = vector.load %arg15[%c0_31, %c0_32] : memref<8x128xf32, #tpu.memory_space<vmem>>, vector<8x128xf32>
    tpu.vector_store %arg15[%c0_31, %c0_32], %30 {strides = array<i32>} : memref<8x128xf32, #tpu.memory_space<vmem>>, vector<8x128xf32>,
    return
  }
  func.func @transform_0(%arg0: i32) -> (i32, i32) {
    %c0_i32 = arith.constant 0 : i32
    %c0_i32_0 = arith.constant 0 : i32
    return %arg0, %c0_i32 : i32, i32
  }
  func.func @transform_1(%arg0: i32) -> (i32, i32) {
    %c0_i32 = arith.constant 0 : i32
    %c0_i32_0 = arith.constant 0 : i32
    %c0_i32_1 = arith.constant 0 : i32
    return %c0_i32, %c0_i32_0 : i32, i32
  }
  func.func @transform_2(%arg0: i32) -> (i32, i32) {
    %c0_i32 = arith.constant 0 : i32
    %c0_i32_0 = arith.constant 0 : i32
    %c0_i32_1 = arith.constant 0 : i32
    return %c0_i32, %c0_i32_0 : i32, i32
  }
  func.func @transform_3(%arg0: i32) -> (i32, i32) {
    %c0_i32 = arith.constant 0 : i32
    %c0_i32_0 = arith.constant 0 : i32
    %c0_i32_1 = arith.constant 0 : i32
    return %c0_i32, %c0_i32_0 : i32, i32
  }
  func.func @transform_4(%arg0: i32) -> (i32, i32) {
    %c0_i32 = arith.constant 0 : i32
    %c0_i32_0 = arith.constant 0 : i32
    %c0_i32_1 = arith.constant 0 : i32
    return %c0_i32, %c0_i32_0 : i32, i32
  }
  func.func @transform_5(%arg0: i32) -> (i32, i32) {
    %c0_i32 = arith.constant 0 : i32
    %c0_i32_0 = arith.constant 0 : i32
    %c0_i32_1 = arith.constant 0 : i32
    return %c0_i32, %c0_i32_0 : i32, i32
  }
  func.func @transform_6(%arg0: i32) -> (i32, i32) {
    %c0_i32 = arith.constant 0 : i32
    %c0_i32_0 = arith.constant 0 : i32
    %c0_i32_1 = arith.constant 0 : i32
    return %c0_i32, %c0_i32_0 : i32, i32
  }
  func.func @transform_7(%arg0: i32) -> (i32, i32) {
    %c0_i32 = arith.constant 0 : i32
    %c0_i32_0 = arith.constant 0 : i32
    %c0_i32_1 = arith.constant 0 : i32
    return %c0_i32, %c0_i32_0 : i32, i32
  }
  func.func @transform_8(%arg0: i32) -> (i32, i32) {
    %c0_i32 = arith.constant 0 : i32
    %c0_i32_0 = arith.constant 0 : i32
    %c0_i32_1 = arith.constant 0 : i32
    return %c0_i32, %c0_i32_0 : i32, i32
  }
  func.func @transform_9(%arg0: i32) -> (i32, i32) {
    %c0_i32 = arith.constant 0 : i32
    %c0_i32_0 = arith.constant 0 : i32
    %c0_i32_1 = arith.constant 0 : i32
    return %c0_i32, %c0_i32_0 : i32, i32
  }
  func.func @transform_10(%arg0: i32) -> (i32, i32) {
    %c0_i32 = arith.constant 0 : i32
    %c0_i32_0 = arith.constant 0 : i32
    return %arg0, %c0_i32 : i32, i32
  }
  func.func @transform_11(%arg0: i32) -> (i32, i32) {
    %c0_i32 = arith.constant 0 : i32
    %c0_i32_0 = arith.constant 0 : i32
    return %arg0, %c0_i32 : i32, i32
  }
  func.func @transform_12(%arg0: i32) -> (i32, i32) {
    %c0_i32 = arith.constant 0 : i32
    %c0_i32_0 = arith.constant 0 : i32
    return %arg0, %c0_i32 : i32, i32
  }
  func.func @transform_13(%arg0: i32) -> (i32, i32) {
    %c0_i32 = arith.constant 0 : i32
    %c0_i32_0 = arith.constant 0 : i32
    return %arg0, %c0_i32 : i32, i32
  }
  func.func @transform_14(%arg0: i32) -> (i32, i32) {
    %c0_i32 = arith.constant 0 : i32
    %c0_i32_0 = arith.constant 0 : i32
    return %arg0, %c0_i32 : i32, i32
  }
}

</mosaic_0001>

<llo_original>
// kernel: textcnn_forward.1
$region0: #{textcnn_forward.1}
  #allocation0 [shape = 'u32[]', space=smem, size = 0x4, offset = 0x4, fixed_abs, tag = 'smem constant byte address 0x4 - core index']
  #allocation1 [shape = 'u32[72,128]{1,0:T(1,128)}', space=vmem, size = 0x9000, scoped, tag = 'internal scratch']
  %s0 = inlined_call_operand.vmem [shape: bf16[128,32], index: 0, kind: input, shape index: {}]
  %s1 = inlined_call_operand.vmem [shape: f32[8,64], index: 1, kind: input, shape index: {}]
  %s2 = inlined_call_operand.vmem [shape: bf16[32,128], index: 2, kind: input, shape index: {}]
  %s3 = inlined_call_operand.vmem [shape: f32[1,128], index: 3, kind: input, shape index: {}]
  %s4 = inlined_call_operand.vmem [shape: f32[1,128], index: 4, kind: input, shape index: {}]
  %s5 = inlined_call_operand.vmem [shape: f32[1,128], index: 5, kind: input, shape index: {}]
  %s6 = inlined_call_operand.vmem [shape: f32[128,128], index: 6, kind: input, shape index: {}]
  %s7 = inlined_call_operand.vmem [shape: f32[1,128], index: 7, kind: input, shape index: {}]
  %s8 = inlined_call_operand.vmem [shape: f32[128,128], index: 8, kind: input, shape index: {}]
  %s9 = inlined_call_operand.vmem [shape: f32[1,128], index: 9, kind: input, shape index: {}]
  %s10 = inlined_call_operand.hbm [shape: f32[128,16], index: 10, kind: output, shape index: {0}]
  %s11 = inlined_call_operand.hbm [shape: f32[16,128], index: 11, kind: output, shape index: {1}]
  %s12 = inlined_call_operand.hbm [shape: f32[16,128], index: 12, kind: output, shape index: {2}]
  %s13 = inlined_call_operand.hbm [shape: f32[16,128], index: 13, kind: output, shape index: {3}]
  %s14 = inlined_call_operand.vmem [shape: f32[16,128], index: 14, kind: output, shape index: {4}]
  %15 = xla_tuple %s10, %s11, %s12, %s13, %s14
  %s16 = sld [smem:[#allocation0]]
  $region105: #{textcnn_forward.1} parent=0
    _
  %s18 = ssub.s32 1, %s16
  %s19 = scalar_select 0, %s18, %s16
  $region1: #{textcnn_forward.1} parent=0
    #allocation2 [shape = 'u8[65536]{0}', space=vmem, size = 0x10000, scoped, tag = 'output window, operand 0']
    #allocation3 [shape = 's32[2]{0}', space=sflag, size = 0x8, scoped, tag = 'scoped memory for textcnn_forward.1']
    #allocation4 [shape = 'u8[8192]{0}', space=vmem, size = 0x2000, scoped, tag = 'output window, operand 1']
    #allocation5 [shape = 's32[2]{0}', space=sflag, size = 0x8, scoped, tag = 'scoped memory for textcnn_forward.1']
    #allocation6 [shape = 'u8[8192]{0}', space=vmem, size = 0x2000, scoped, tag = 'output window, operand 2']
    #allocation7 [shape = 'u8[8192]{0}', space=vmem, size = 0x2000, scoped, tag = 'output window, operand 3']
    #allocation8 [shape = 's32[2]{0}', space=sflag, size = 0x8, scoped, tag = 'scoped memory for textcnn_forward.1']
    %20 = vsyncpa [#allocation3], 0
    %s21 = scalar_lea.sflag [#allocation3], 1
    %22 = vsyncpa %s21, 0
    %23 = vsyncpa [#allocation5], 0
    %s24 = scalar_lea.sflag [#allocation5], 1
    %25 = vsyncpa %s24, 0
    %26 = vsyncpa [#allocation8], 0
    %s27 = scalar_lea.sflag [#allocation8], 1
    %28 = vsyncpa %s27, 0
    loop: start=0, step=1, limit=4
    $region2: #{textcnn_forward.1} parent=1 // loop_pre_header
      _
    $region3: #{textcnn_forward.1} parent=1 // loop_header
      %s30 = sphi 0, %s34
      %p31 = scmp.ge.s32.totalorder %s30, 4
      %s40 = sphi 0, %s42
      %s43 = sphi 0, %s40
      %s44 = sphi 0, %s43
      %s60 = sphi 0, %s44
      %s64 = sphi 0, %s64
      %s66 = sphi 0, %s64
      %s67 = sphi 0, %s66
      %s81 = sphi 0, %s67
      %s85 = sphi 0, %s85
      %s87 = sphi 0, %s85
      %s88 = sphi 0, %s87
      %s102 = sphi 0, %s88
      %s106 = sphi 0, %s106
      %s108 = sphi 0, %s106
      %s109 = sphi 0, %s108
      %s123 = sphi 0, %s109
      %s127 = sphi 0, %s127
      %s129 = sphi 0, %s127
      %s130 = sphi 0, %s129
      %s144 = sphi 0, %s130
      %s148 = sphi 0, %s148
      %s150 = sphi 0, %s148
      %s151 = sphi 0, %s150
      %s165 = sphi 0, %s151
      %s169 = sphi 0, %s169
      %s171 = sphi 0, %s169
      %s172 = sphi 0, %s171
      %s186 = sphi 0, %s172
      %s190 = sphi 0, %s190
      %s192 = sphi 0, %s190
      %s193 = sphi 0, %s192
      %s207 = sphi 0, %s193
      %s211 = sphi 0, %s211
      %s213 = sphi 0, %s211
      %s214 = sphi 0, %s213
      %s228 = sphi 0, %s214
      %s232 = sphi 0, %s232
      %s234 = sphi 0, %s232
      %s235 = sphi 0, %s234
      %s249 = sphi 0, %s235
      %s255 = sphi 0, %s257
      %s258 = sphi 0, %s255
      %s259 = sphi 0, %s258
      %s275 = sphi 0, %s259
      %s281 = sphi 0, %s283
      %s284 = sphi 0, %s281
      %s285 = sphi 0, %s284
      %s301 = sphi 0, %s285
      %s307 = sphi 0, %s309
      %s310 = sphi 0, %s307
      %s311 = sphi 0, %s310
      %s327 = sphi 0, %s311
      %s333 = sphi 0, %s335
      %s336 = sphi 0, %s333
      %s337 = sphi 0, %s336
      %s353 = sphi 0, %s337
      %s359 = sphi 0, %s361
      %s362 = sphi 0, %s359
      %s363 = sphi 0, %s362
      %s379 = sphi 0, %s363
    $region4: #{textcnn_forward.1} parent=1 // loop_header_branch
      %33 = sbr.rel (%p31) target = $region8
    $region5: #{textcnn_forward.1} parent=1 // loop_body
      %s35 = ssub.s32 %s30, 1
      %s36 = ssub.s32 %s30, 2
      %s37 = sadd.s32 %s30, 1
      %s38 = ssub.s32 %s30, %s37
      %p39 = scmp.eq.s32.totalorder %s38, 0
      %s41 = sadd.s32 %s40, 1
      %s42 = scalar_select %p39, %s40, %s41
      %p45 = pneg %p39
      %p46 = scmp.eq.s32.totalorder %s30, 1
      %p47 = por %p45, %p46
      %p48 = scmp.ne.s32.totalorder %s40, %s43
      %p49 = scmp.eq.s32.totalorder %s30, 0
      %p50 = por %p48, %p49
      %p51 = scmp.ne.s32.totalorder %s40, %s43
      %p52 = scmp.eq.s32.totalorder %s35, 1
      %p53 = por %p51, %p52
      %p54 = scmp.ne.s32.totalorder %s43, %s44
      %p55 = scmp.eq.s32.totalorder %s35, 0
      %p56 = por %p54, %p55
      %p57 = scmp.ne.s32.totalorder %s43, %s44
      %p58 = scmp.eq.s32.totalorder %s36, 1
      %p59 = por %p57, %p58
      %p61 = scmp.ne.s32.totalorder %s44, %s60
      %p62 = scmp.eq.s32.totalorder %s36, 0
      %p63 = por %p61, %p62
      %s65 = sadd.s32 %s64, 1
      %p68 = scmp.eq.s32.totalorder %s30, 1
      %p69 = scmp.ne.s32.totalorder %s64, %s66
      %p70 = scmp.eq.s32.totalorder %s30, 0
      %p71 = por %p69, %p70
      %p72 = scmp.ne.s32.totalorder %s64, %s66
      %p73 = scmp.eq.s32.totalorder %s35, 1
      %p74 = por %p72, %p73
      %p75 = scmp.ne.s32.totalorder %s66, %s67
      %p76 = scmp.eq.s32.totalorder %s35, 0
      %p77 = por %p75, %p76
      %p78 = scmp.ne.s32.totalorder %s66, %s67
      %p79 = scmp.eq.s32.totalorder %s36, 1
      %p80 = por %p78, %p79
      %p82 = scmp.ne.s32.totalorder %s67, %s81
      %p83 = scmp.eq.s32.totalorder %s36, 0
      %p84 = por %p82, %p83
      %s86 = sadd.s32 %s85, 1
      %p89 = scmp.eq.s32.totalorder %s30, 1
      %p90 = scmp.ne.s32.totalorder %s85, %s87
      %p91 = scmp.eq.s32.totalorder %s30, 0
      %p92 = por %p90, %p91
      %p93 = scmp.ne.s32.totalorder %s85, %s87
      %p94 = scmp.eq.s32.totalorder %s35, 1
      %p95 = por %p93, %p94
      %p96 = scmp.ne.s32.totalorder %s87, %s88
      %p97 = scmp.eq.s32.totalorder %s35, 0
      %p98 = por %p96, %p97
      %p99 = scmp.ne.s32.totalorder %s87, %s88
      %p100 = scmp.eq.s32.totalorder %s36, 1
      %p101 = por %p99, %p100
      %p103 = scmp.ne.s32.totalorder %s88, %s102
      %p104 = scmp.eq.s32.totalorder %s36, 0
      %p105 = por %p103, %p104
      %s107 = sadd.s32 %s106, 1
      %p110 = scmp.eq.s32.totalorder %s30, 1
      %p111 = scmp.ne.s32.totalorder %s106, %s108
      %p112 = scmp.eq.s32.totalorder %s30, 0
      %p113 = por %p111, %p112
      %p114 = scmp.ne.s32.totalorder %s106, %s108
      %p115 = scmp.eq.s32.totalorder %s35, 1
      %p116 = por %p114, %p115
      %p117 = scmp.ne.s32.totalorder %s108, %s109
      %p118 = scmp.eq.s32.totalorder %s35, 0
      %p119 = por %p117, %p118
      %p120 = scmp.ne.s32.totalorder %s108, %s109
      %p121 = scmp.eq.s32.totalorder %s36, 1
      %p122 = por %p120, %p121
      %p124 = scmp.ne.s32.totalorder %s109, %s123
      %p125 = scmp.eq.s32.totalorder %s36, 0
      %p126 = por %p124, %p125
      %s128 = sadd.s32 %s127, 1
      %p131 = scmp.eq.s32.totalorder %s30, 1
      %p132 = scmp.ne.s32.totalorder %s127, %s129
      %p133 = scmp.eq.s32.totalorder %s30, 0
      %p134 = por %p132, %p133
      %p135 = scmp.ne.s32.totalorder %s127, %s129
      %p136 = scmp.eq.s32.totalorder %s35, 1
      %p137 = por %p135, %p136
      %p138 = scmp.ne.s32.totalorder %s129, %s130
      %p139 = scmp.eq.s32.totalorder %s35, 0
      %p140 = por %p138, %p139
      %p141 = scmp.ne.s32.totalorder %s129, %s130
      %p142 = scmp.eq.s32.totalorder %s36, 1
      %p143 = por %p141, %p142
      %p145 = scmp.ne.s32.totalorder %s130, %s144
      %p146 = scmp.eq.s32.totalorder %s36, 0
      %p147 = por %p145, %p146
      %s149 = sadd.s32 %s148, 1
      %p152 = scmp.eq.s32.totalorder %s30, 1
      %p153 = scmp.ne.s32.totalorder %s148, %s150
      %p154 = scmp.eq.s32.totalorder %s30, 0
      %p155 = por %p153, %p154
      %p156 = scmp.ne.s32.totalorder %s148, %s150
      %p157 = scmp.eq.s32.totalorder %s35, 1
      %p158 = por %p156, %p157
      %p159 = scmp.ne.s32.totalorder %s150, %s151
      %p160 = scmp.eq.s32.totalorder %s35, 0
      %p161 = por %p159, %p160
      %p162 = scmp.ne.s32.totalorder %s150, %s151
      %p163 = scmp.eq.s32.totalorder %s36, 1
      %p164 = por %p162, %p163
      %p166 = scmp.ne.s32.totalorder %s151, %s165
      %p167 = scmp.eq.s32.totalorder %s36, 0
      %p168 = por %p166, %p167
      %s170 = sadd.s32 %s169, 1
      %p173 = scmp.eq.s32.totalorder %s30, 1
      %p174 = scmp.ne.s32.totalorder %s169, %s171
      %p175 = scmp.eq.s32.totalorder %s30, 0
      %p176 = por %p174, %p175
      %p177 = scmp.ne.s32.totalorder %s169, %s171
      %p178 = scmp.eq.s32.totalorder %s35, 1
      %p179 = por %p177, %p178
      %p180 = scmp.ne.s32.totalorder %s171, %s172
      %p181 = scmp.eq.s32.totalorder %s35, 0
      %p182 = por %p180, %p181
      %p183 = scmp.ne.s32.totalorder %s171, %s172
      %p184 = scmp.eq.s32.totalorder %s36, 1
      %p185 = por %p183, %p184
      %p187 = scmp.ne.s32.totalorder %s172, %s186
      %p188 = scmp.eq.s32.totalorder %s36, 0
      %p189 = por %p187, %p188
      %s191 = sadd.s32 %s190, 1
      %p194 = scmp.eq.s32.totalorder %s30, 1
      %p195 = scmp.ne.s32.totalorder %s190, %s192
      %p196 = scmp.eq.s32.totalorder %s30, 0
      %p197 = por %p195, %p196
      %p198 = scmp.ne.s32.totalorder %s190, %s192
      %p199 = scmp.eq.s32.totalorder %s35, 1
      %p200 = por %p198, %p199
      %p201 = scmp.ne.s32.totalorder %s192, %s193
      %p202 = scmp.eq.s32.totalorder %s35, 0
      %p203 = por %p201, %p202
      %p204 = scmp.ne.s32.totalorder %s192, %s193
      %p205 = scmp.eq.s32.totalorder %s36, 1
      %p206 = por %p204, %p205
      %p208 = scmp.ne.s32.totalorder %s193, %s207
      %p209 = scmp.eq.s32.totalorder %s36, 0
      %p210 = por %p208, %p209
      %s212 = sadd.s32 %s211, 1
      %p215 = scmp.eq.s32.totalorder %s30, 1
      %p216 = scmp.ne.s32.totalorder %s211, %s213
      %p217 = scmp.eq.s32.totalorder %s30, 0
      %p218 = por %p216, %p217
      %p219 = scmp.ne.s32.totalorder %s211, %s213
      %p220 = scmp.eq.s32.totalorder %s35, 1
      %p221 = por %p219, %p220
      %p222 = scmp.ne.s32.totalorder %s213, %s214
      %p223 = scmp.eq.s32.totalorder %s35, 0
      %p224 = por %p222, %p223
      %p225 = scmp.ne.s32.totalorder %s213, %s214
      %p226 = scmp.eq.s32.totalorder %s36, 1
      %p227 = por %p225, %p226
      %p229 = scmp.ne.s32.totalorder %s214, %s228
      %p230 = scmp.eq.s32.totalorder %s36, 0
      %p231 = por %p229, %p230
      %s233 = sadd.s32 %s232, 1
      %p236 = scmp.eq.s32.totalorder %s30, 1
      %p237 = scmp.ne.s32.totalorder %s232, %s234
      %p238 = scmp.eq.s32.totalorder %s30, 0
      %p239 = por %p237, %p238
      %p240 = scmp.ne.s32.totalorder %s232, %s234
      %p241 = scmp.eq.s32.totalorder %s35, 1
      %p242 = por %p240, %p241
      %p243 = scmp.ne.s32.totalorder %s234, %s235
      %p244 = scmp.eq.s32.totalorder %s35, 0
      %p245 = por %p243, %p244
      %p246 = scmp.ne.s32.totalorder %s234, %s235
      %p247 = scmp.eq.s32.totalorder %s36, 1
      %p248 = por %p246, %p247
      %p250 = scmp.ne.s32.totalorder %s235, %s249
      %p251 = scmp.eq.s32.totalorder %s36, 0
      %p252 = por %p250, %p251
      %s253 = ssub.s32 %s30, %s37
      %p254 = scmp.eq.s32.totalorder %s253, 0
      %s256 = sadd.s32 %s255, 1
      %s257 = scalar_select %p254, %s255, %s256
      %p260 = pneg %p254
      %p261 = scmp.eq.s32.totalorder %s30, 1
      %p262 = por %p260, %p261
      %p263 = scmp.ne.s32.totalorder %s255, %s258
      %p264 = scmp.eq.s32.totalorder %s30, 0
      %p265 = por %p263, %p264
      %p266 = scmp.ne.s32.totalorder %s255, %s258
      %p267 = scmp.eq.s32.totalorder %s35, 1
      %p268 = por %p266, %p267
      %p269 = scmp.ne.s32.totalorder %s258, %s259
      %p270 = scmp.eq.s32.totalorder %s35, 0
      %p271 = por %p269, %p270
      %p272 = scmp.ne.s32.totalorder %s258, %s259
      %p273 = scmp.eq.s32.totalorder %s36, 1
      %p274 = por %p272, %p273
      %p276 = scmp.ne.s32.totalorder %s259, %s275
      %p277 = scmp.eq.s32.totalorder %s36, 0
      %p278 = por %p276, %p277
      %s279 = ssub.s32 %s30, %s37
      %p280 = scmp.eq.s32.totalorder %s279, 0
      %s282 = sadd.s32 %s281, 1
      %s283 = scalar_select %p280, %s281, %s282
      %p286 = pneg %p280
      %p287 = scmp.eq.s32.totalorder %s30, 1
      %p288 = por %p286, %p287
      %p289 = scmp.ne.s32.totalorder %s281, %s284
      %p290 = scmp.eq.s32.totalorder %s30, 0
      %p291 = por %p289, %p290
      %p292 = scmp.ne.s32.totalorder %s281, %s284
      %p293 = scmp.eq.s32.totalorder %s35, 1
      %p294 = por %p292, %p293
      %p295 = scmp.ne.s32.totalorder %s284, %s285
      %p296 = scmp.eq.s32.totalorder %s35, 0
      %p297 = por %p295, %p296
      %p298 = scmp.ne.s32.totalorder %s284, %s285
      %p299 = scmp.eq.s32.totalorder %s36, 1
      %p300 = por %p298, %p299
      %p302 = scmp.ne.s32.totalorder %s285, %s301
      %p303 = scmp.eq.s32.totalorder %s36, 0
      %p304 = por %p302, %p303
      %s305 = ssub.s32 %s30, %s37
      %p306 = scmp.eq.s32.totalorder %s305, 0
      %s308 = sadd.s32 %s307, 1
      %s309 = scalar_select %p306, %s307, %s308
      %p312 = pneg %p306
      %p313 = scmp.eq.s32.totalorder %s30, 1
      %p314 = por %p312, %p313
      %p315 = scmp.ne.s32.totalorder %s307, %s310
      %p316 = scmp.eq.s32.totalorder %s30, 0
      %p317 = por %p315, %p316
      %p318 = scmp.ne.s32.totalorder %s307, %s310
      %p319 = scmp.eq.s32.totalorder %s35, 1
      %p320 = por %p318, %p319
      %p321 = scmp.ne.s32.totalorder %s310, %s311
      %p322 = scmp.eq.s32.totalorder %s35, 0
      %p323 = por %p321, %p322
      %p324 = scmp.ne.s32.totalorder %s310, %s311
      %p325 = scmp.eq.s32.totalorder %s36, 1
      %p326 = por %p324, %p325
      %p328 = scmp.ne.s32.totalorder %s311, %s327
      %p329 = scmp.eq.s32.totalorder %s36, 0
      %p330 = por %p328, %p329
      %s331 = ssub.s32 %s30, %s37
      %p332 = scmp.eq.s32.totalorder %s331, 0
      %s334 = sadd.s32 %s333, 1
      %s335 = scalar_select %p332, %s333, %s334
      %p338 = pneg %p332
      %p339 = scmp.eq.s32.totalorder %s30, 1
      %p340 = por %p338, %p339
      %p341 = scmp.ne.s32.totalorder %s333, %s336
      %p342 = scmp.eq.s32.totalorder %s30, 0
      %p343 = por %p341, %p342
      %p344 = scmp.ne.s32.totalorder %s333, %s336
      %p345 = scmp.eq.s32.totalorder %s35, 1
      %p346 = por %p344, %p345
      %p347 = scmp.ne.s32.totalorder %s336, %s337
      %p348 = scmp.eq.s32.totalorder %s35, 0
      %p349 = por %p347, %p348
      %p350 = scmp.ne.s32.totalorder %s336, %s337
      %p351 = scmp.eq.s32.totalorder %s36, 1
      %p352 = por %p350, %p351
      %p354 = scmp.ne.s32.totalorder %s337, %s353
      %p355 = scmp.eq.s32.totalorder %s36, 0
      %p356 = por %p354, %p355
      %s357 = ssub.s32 %s30, %s37
      %p358 = scmp.eq.s32.totalorder %s357, 0
      %s360 = sadd.s32 %s359, 1
      %s361 = scalar_select %p358, %s359, %s360
      %p364 = pneg %p358
      %p365 = scmp.eq.s32.totalorder %s30, 1
      %p366 = por %p364, %p365
      %p367 = scmp.ne.s32.totalorder %s359, %s362
      %p368 = scmp.eq.s32.totalorder %s30, 0
      %p369 = por %p367, %p368
      %p370 = scmp.ne.s32.totalorder %s359, %s362
      %p371 = scmp.eq.s32.totalorder %s35, 1
      %p372 = por %p370, %p371
      %p373 = scmp.ne.s32.totalorder %s362, %s363
      %p374 = scmp.eq.s32.totalorder %s35, 0
      %p375 = por %p373, %p374
      %p376 = scmp.ne.s32.totalorder %s362, %s363
      %p377 = scmp.eq.s32.totalorder %s36, 1
      %p378 = por %p376, %p377
      %p380 = scmp.ne.s32.totalorder %s363, %s379
      %p381 = scmp.eq.s32.totalorder %s36, 0
      %p382 = por %p380, %p381
      %p383 = scmp.le.s32.totalorder 1, %s30
      %p384 = scmp.lt.s32.totalorder %s30, 3
      %p385 = pnand %p383, %p384
      %p386 = pneg %p385
      // Predicated region
      $region9: #{textcnn_forward.1} parent=5 // pred_check
        _
      $region10: #{textcnn_forward.1} parent=5 // pred_check_branch
        %388 = sbr.rel (%p385) target = $region12
      $region11: #{textcnn_forward.1} parent=5 // pred_region
        %s389 = ssub.s32 %s30, 1
        // Predicated region
        $region13: #{textcnn_forward.1} parent=11 // pred_check
          %p390 = pneg %p77
        $region14: #{textcnn_forward.1} parent=11 // pred_check_branch
          %392 = sbr.rel (%p390) target = $region16
        $region15: #{textcnn_forward.1} parent=11 // pred_region
          _
        $region16: #{textcnn_forward.1} parent=11 // pred_fallthru
          _
        // Predicated region
        $region17: #{textcnn_forward.1} parent=11 // pred_check
          %p393 = pneg %p98
        $region18: #{textcnn_forward.1} parent=11 // pred_check_branch
          %395 = sbr.rel (%p393) target = $region20
        $region19: #{textcnn_forward.1} parent=11 // pred_region
          _
        $region20: #{textcnn_forward.1} parent=11 // pred_fallthru
          _
        // Predicated region
        $region21: #{textcnn_forward.1} parent=11 // pred_check
          %p396 = pneg %p119
        $region22: #{textcnn_forward.1} parent=11 // pred_check_branch
          %398 = sbr.rel (%p396) target = $region24
        $region23: #{textcnn_forward.1} parent=11 // pred_region
          _
        $region24: #{textcnn_forward.1} parent=11 // pred_fallthru
          _
        // Predicated region
        $region25: #{textcnn_forward.1} parent=11 // pred_check
          %p399 = pneg %p140
        $region26: #{textcnn_forward.1} parent=11 // pred_check_branch
          %401 = sbr.rel (%p399) target = $region28
        $region27: #{textcnn_forward.1} parent=11 // pred_region
          _
        $region28: #{textcnn_forward.1} parent=11 // pred_fallthru
          _
        // Predicated region
        $region29: #{textcnn_forward.1} parent=11 // pred_check
          %p402 = pneg %p161
        $region30: #{textcnn_forward.1} parent=11 // pred_check_branch
          %404 = sbr.rel (%p402) target = $region32
        $region31: #{textcnn_forward.1} parent=11 // pred_region
          _
        $region32: #{textcnn_forward.1} parent=11 // pred_fallthru
          _
        // Predicated region
        $region33: #{textcnn_forward.1} parent=11 // pred_check
          %p405 = pneg %p182
        $region34: #{textcnn_forward.1} parent=11 // pred_check_branch
          %407 = sbr.rel (%p405) target = $region36
        $region35: #{textcnn_forward.1} parent=11 // pred_region
          _
        $region36: #{textcnn_forward.1} parent=11 // pred_fallthru
          _
        // Predicated region
        $region37: #{textcnn_forward.1} parent=11 // pred_check
          %p408 = pneg %p203
        $region38: #{textcnn_forward.1} parent=11 // pred_check_branch
          %410 = sbr.rel (%p408) target = $region40
        $region39: #{textcnn_forward.1} parent=11 // pred_region
          _
        $region40: #{textcnn_forward.1} parent=11 // pred_fallthru
          _
        // Predicated region
        $region41: #{textcnn_forward.1} parent=11 // pred_check
          %p411 = pneg %p224
        $region42: #{textcnn_forward.1} parent=11 // pred_check_branch
          %413 = sbr.rel (%p411) target = $region44
        $region43: #{textcnn_forward.1} parent=11 // pred_region
          _
        $region44: #{textcnn_forward.1} parent=11 // pred_fallthru
          _
        // Predicated region
        $region45: #{textcnn_forward.1} parent=11 // pred_check
          %p414 = pneg %p245
        $region46: #{textcnn_forward.1} parent=11 // pred_check_branch
          %416 = sbr.rel (%p414) target = $region48
        $region47: #{textcnn_forward.1} parent=11 // pred_region
          _
        $region48: #{textcnn_forward.1} parent=11 // pred_fallthru
          _
      $region12: #{textcnn_forward.1} parent=5 // pred_fallthru
        _
      %p417 = scmp.lt.s32.totalorder %s30, 2
      // Predicated region
      $region49: #{textcnn_forward.1} parent=5 // pred_check
        %p418 = pneg %p417
      $region50: #{textcnn_forward.1} parent=5 // pred_check_branch
        %420 = sbr.rel (%p418) target = $region52
      $region51: #{textcnn_forward.1} parent=5 // pred_region
        // Predicated region
        $region53: #{textcnn_forward.1} parent=51 // pred_check
          %p421 = pneg %p50
        $region54: #{textcnn_forward.1} parent=51 // pred_check_branch
          %423 = sbr.rel (%p421) target = $region56
        $region55: #{textcnn_forward.1} parent=51 // pred_region
          %s424 = smul.u32 8, %s30
          %p425 = scmp.lt.s32.totalorder %s424, 15
          %s426 = scalar_select %p425, %s424, 15
          %s427 = smul.addr %s426, 4
          %s428 = scalar_lea.vmem %s0, %s427
          %s429 = smul.u32 8, %s30
        $region56: #{textcnn_forward.1} parent=51 // pred_fallthru
          _
      $region52: #{textcnn_forward.1} parent=5 // pred_fallthru
        _
      %p430 = scmp.le.s32.totalorder 1, %s30
      %p431 = scmp.lt.s32.totalorder %s30, 3
      %p432 = pnand %p430, %p431
      %p433 = pneg %p432
      // Predicated region
      $region57: #{textcnn_forward.1} parent=5 // pred_check
        _
      $region58: #{textcnn_forward.1} parent=5 // pred_check_branch
        %435 = sbr.rel (%p432) target = $region60
      $region59: #{textcnn_forward.1} parent=5 // pred_region
        %s436 = ssub.s32 %s30, 1
        %s437 = smul.u32 8, %s35
        %p438 = scmp.lt.s32.totalorder %s437, 15
        %s439 = scalar_select %p438, %s437, 15
        %s440 = smul.addr %s439, 4
        %s441 = scalar_lea.vmem %s0, %s440
        %p442 = pneg %p56
        %p443 = pneg %p53
        %p444 = pneg %p77
        %p445 = pneg %p74
        %p446 = pneg %p98
        %p447 = pneg %p95
        %p448 = pneg %p119
        %p449 = pneg %p116
        %p450 = pneg %p140
        %p451 = pneg %p137
        %p452 = pneg %p161
        %p453 = pneg %p158
        %p454 = pneg %p182
        %p455 = pneg %p179
        %p456 = pneg %p203
        %p457 = pneg %p200
        %p458 = pneg %p224
        %p459 = pneg %p221
        %p460 = pneg %p245
        %p461 = pneg %p242
        %p462 = pneg %p271
        %p463 = pneg %p268
        %s464 = sand.u32 %s258, 1
        %s465 = scalar_lea.sflag [#allocation3], %s464
        %s466 = sand.u32 %s258, 1
        %s467 = smul.addr %s466, 64
        %s468 = scalar_lea.vmem [#allocation2], %s467
        %p469 = pneg %p297
        %p470 = pneg %p294
        %s471 = sand.u32 %s35, 1
        %s472 = scalar_lea.sflag [#allocation5], %s471
        %s473 = sand.u32 %s284, 1
        %s474 = smul.addr %s473, 8
        %s475 = scalar_lea.vmem [#allocation4], %s474
        %p476 = pneg %p323
        %p477 = pneg %p320
        %s478 = sand.u32 %s35, 1
        %s479 = scalar_lea.sflag [#allocation5], %s478
        %s480 = sand.u32 %s310, 1
        %s481 = smul.addr %s480, 8
        %s482 = scalar_lea.vmem [#allocation6], %s481
        %p483 = pneg %p349
        %p484 = pneg %p346
        %s485 = sand.u32 %s336, 1
        %s486 = scalar_lea.sflag [#allocation8], %s485
        %s487 = sand.u32 %s336, 1
        %s488 = smul.addr %s487, 8
        %s489 = scalar_lea.vmem [#allocation7], %s488
        %p490 = pneg %p375
        %p491 = pneg %p372
        %p492 = scmp.lt.s32.totalorder %s35, 1
        %s493 = scalar_select %p492, %s35, 1
        %s494 = smul.addr %s493, 8
        %s495 = scalar_lea.vmem %s14, %s494
        %s496 = smul.u32 8, %s35
        %p497 = scmp.lt.s32.totalorder %s496, 15
        %s498 = scalar_select %p497, %s496, 15
        %s499 = smul.addr %s498, 4
        %s500 = scalar_lea.vmem %s0, %s499
        %s501 = smul.u32 8, %s35
        %s502 = smul.u32 8, %s35
        %p503 = scmp.lt.s32.totalorder %s35, 1
        %s504 = scalar_select %p503, %s35, 1
        %s505 = smul.addr %s504, 8
        %s506 = scalar_lea.vmem %s14, %s505
        %v508 = vld [vmem:[%s500] sm:$0xf]
        %v509 = vld [vmem:[%s500 + $0x4] sm:$0xf]
        %v510 = vld [vmem:[%s500 + $0x8] sm:$0xf]
        %v511 = vld [vmem:[%s500 + $0xc] sm:$0xf]
        %v512 = vld [vmem:[%s500 + $0x10] sm:$0xf]
        %v513 = vld [vmem:[%s500 + $0x14] sm:$0xf]
        %v514 = vld [vmem:[%s500 + $0x18] sm:$0xf]
        %v515 = vld [vmem:[%s500 + $0x1c] sm:$0xf]
        %v516 = vld [vmem:[%s2] sm:$0xf]
        %v517 = vld [vmem:[%s2 + $0x4] sm:$0xf]
        %v518 = vld [vmem:[%s2 + $0x8] sm:$0xf]
        %v519 = vld [vmem:[%s2 + $0xc] sm:$0xf]
        %v520 = vld [vmem:[%s3] sm:$0x1]
        %v522 = vperm.slane %v520, 0
        %v532 = vunpack.c.l.b16 %v508
        %v533 = vunpack.c.l.b16 %v509
        %v534 = vunpack.c.l.b16 %v510
        %v535 = vunpack.c.l.b16 %v511
        %v536 = vunpack.c.l.b16 %v512
        %v537 = vunpack.c.l.b16 %v513
        %v538 = vunpack.c.l.b16 %v514
        %v539 = vunpack.c.l.b16 %v515
        %v540 = vpack.c.b16 %v533, %v532
        %v541 = vpack.c.b16 %v535, %v534
        %v542 = vpack.c.b16 %v537, %v536
        %v543 = vpack.c.b16 %v539, %v538
        %v548 = vunpack.c.l.b16 %v516
        %v549 = vunpack.c.l.b16 %v517
        %v550 = vunpack.c.l.b16 %v518
        %v551 = vunpack.c.l.b16 %v519
        %v552 = vpack.c.b16 %v549, %v548
        %v553 = vpack.c.b16 %v551, %v550
        %vm556 = vcmask 261120
        %v558 = vsel %vm556, %v540, 0
        %v561 = vsel %vm556, %v541, 0
        %v564 = vsel %vm556, %v542, 0
        %v567 = vsel %vm556, %v543, 0
        %569 = vmatpush.bf16.msra.mxu0 0
        %570 = vmatpush.bf16.msra.mxu0 0
        %571 = vmatpush.bf16.msra.mxu0 0
        %572 = vmatpush.bf16.msra.mxu0 0
        %573 = vmatpush.bf16.msra.mxu0 0
        %574 = vmatpush.bf16.msra.mxu0 0
        %575 = vmatpush.bf16.msra.mxu0 %v553
        %576 = vmatpush.bf16.msra.mxu0 %v552
        %577 = vmatmul.bf16.gmra.mxu0 %v558
        %v578 = vpop.f32.mrf.mxu0
        %v579 = vadd.f32 %v522, %v578
        %v580 = vpop.f32.mrf.mxu0
        %v581 = vadd.f32 %v522, %v580
        %582 = vmatmul.bf16.gmra.mxu0 %v561
        %v583 = vpop.f32.mrf.mxu0
        %v584 = vadd.f32 %v522, %v583
        %v585 = vpop.f32.mrf.mxu0
        %v586 = vadd.f32 %v522, %v585
        %587 = vmatmul.bf16.gmra.mxu0 %v564
        %v588 = vpop.f32.mrf.mxu0
        %v589 = vadd.f32 %v522, %v588
        %v590 = vpop.f32.mrf.mxu0
        %v591 = vadd.f32 %v522, %v590
        %592 = vmatmul.bf16.gmra.mxu0 %v567
        %v593 = vpop.f32.mrf.mxu0
        %v594 = vadd.f32 %v522, %v593
        %v595 = vpop.f32.mrf.mxu0
        %v596 = vadd.f32 %v522, %v595
        %597 = vdwg.mxu0
        %v598 = vmax.f32 %v579, 0.0
        %v599 = vmax.f32 %v581, 0.0
        %v600 = vmax.f32 %v584, 0.0
        %v601 = vmax.f32 %v586, 0.0
        %v602 = vmax.f32 %v589, 0.0
        %v603 = vmax.f32 %v591, 0.0
        %v604 = vmax.f32 %v594, 0.0
        %v605 = vmax.f32 %v596, 0.0
        %vm606 = vcmask 130048
        %607 = vst.msk [vmem:[%s468] sm:$0xff] %vm606, %v598
        %608 = vst.msk [vmem:[%s468 + $0x8] sm:$0xff] %vm606, %v599
        %609 = vst.msk [vmem:[%s468 + $0x10] sm:$0xff] %vm606, %v600
        %610 = vst.msk [vmem:[%s468 + $0x18] sm:$0xff] %vm606, %v601
        %611 = vst.msk [vmem:[%s468 + $0x20] sm:$0xff] %vm606, %v602
        %612 = vst.msk [vmem:[%s468 + $0x28] sm:$0xff] %vm606, %v603
        %613 = vst.msk [vmem:[%s468 + $0x30] sm:$0xff] %vm606, %v604
        %614 = vst.msk [vmem:[%s468 + $0x38] sm:$0xff] %vm606, %v605
        %v615 = vld [vmem:[%s1] sm:$0xff]
        %vm616 = vcmask 523264
        %v618 = vsel %vm616, %v615, 0
        %620 = vmatpush.msra.mxu0 0.0
        %621 = vmatpush.msra.mxu0 0.0
        %622 = vmatpush.msra.mxu0 0.0
        %623 = vmatpush.msra.mxu0 0.0
        %624 = vmatpush.msra.mxu0 0.0
        %625 = vmatpush.msra.mxu0 0.0
        %626 = vmatpush.msra.mxu0 0.0
        %627 = vmatpush.msra.mxu0 0.0
        %628 = vmatpush.msra.mxu0 %v605
        %629 = vmatpush.msra.mxu0 %v604
        %630 = vmatpush.msra.mxu0 %v603
        %631 = vmatpush.msra.mxu0 %v602
        %632 = vmatpush.msra.mxu0 %v601
        %633 = vmatpush.msra.mxu0 %v600
        %634 = vmatpush.msra.mxu0 %v599
        %635 = vmatpush.msra.mxu0 %v598
        %636 = vmatmul.f32.gmra.mxu0 %v618
        %v637 = vpop.f32.mrf.mxu0
        %v638 = vadd.f32 0.0, %v637
        %639 = vdwg.mxu0
        %640 = vst [vmem:[%s475] sm:$0xff] %v638
        %v641 = vld [vmem:[%s4] sm:$0x1]
        %v643 = vperm.slane %v641, 0
        %v645 = vmul.f32 %v638, %v643
        %v646 = vld [vmem:[%s5] sm:$0x1]
        %v648 = vperm.slane %v646, 0
        %v650 = vadd.f32 %v645, %v648
        %651 = vst [vmem:[%s482] sm:$0xff] %v650
        %v652 = vld [vmem:[%s6] sm:$0xff]
        %v653 = vld [vmem:[%s6 + $0x8] sm:$0xff]
        %v654 = vld [vmem:[%s6 + $0x10] sm:$0xff]
        %v655 = vld [vmem:[%s6 + $0x18] sm:$0xff]
        %v656 = vld [vmem:[%s6 + $0x20] sm:$0xff]
        %v657 = vld [vmem:[%s6 + $0x28] sm:$0xff]
        %v658 = vld [vmem:[%s6 + $0x30] sm:$0xff]
        %v659 = vld [vmem:[%s6 + $0x38] sm:$0xff]
        %v660 = vld [vmem:[%s6 + $0x40] sm:$0xff]
        %v661 = vld [vmem:[%s6 + $0x48] sm:$0xff]
        %v662 = vld [vmem:[%s6 + $0x50] sm:$0xff]
        %v663 = vld [vmem:[%s6 + $0x58] sm:$0xff]
        %v664 = vld [vmem:[%s6 + $0x60] sm:$0xff]
        %v665 = vld [vmem:[%s6 + $0x68] sm:$0xff]
        %v666 = vld [vmem:[%s6 + $0x70] sm:$0xff]
        %v667 = vld [vmem:[%s6 + $0x78] sm:$0xff]
        %v668 = vld [vmem:[%s7] sm:$0x1]
        %v670 = vperm.slane %v668, 0
        %672 = vmatpush.msra.mxu0 %v667
        %673 = vmatpush.msra.mxu0 %v666
        %674 = vmatpush.msra.mxu0 %v665
        %675 = vmatpush.msra.mxu0 %v664
        %676 = vmatpush.msra.mxu0 %v663
        %677 = vmatpush.msra.mxu0 %v662
        %678 = vmatpush.msra.mxu0 %v661
        %679 = vmatpush.msra.mxu0 %v660
        %680 = vmatpush.msra.mxu0 %v659
        %681 = vmatpush.msra.mxu0 %v658
        %682 = vmatpush.msra.mxu0 %v657
        %683 = vmatpush.msra.mxu0 %v656
        %684 = vmatpush.msra.mxu0 %v655
        %685 = vmatpush.msra.mxu0 %v654
        %686 = vmatpush.msra.mxu0 %v653
        %687 = vmatpush.msra.mxu0 %v652
        %688 = vmatmul.f32.gmra.mxu0 %v650
        %v689 = vpop.f32.mrf.mxu0
        %v690 = vadd.f32 %v670, %v689
        %691 = vdwg.mxu0
        %692 = vst [vmem:[%s489] sm:$0xff] %v690
        %v693 = vld [vmem:[%s8] sm:$0xff]
        %v694 = vld [vmem:[%s8 + $0x8] sm:$0xff]
        %v695 = vld [vmem:[%s8 + $0x10] sm:$0xff]
        %v696 = vld [vmem:[%s8 + $0x18] sm:$0xff]
        %v697 = vld [vmem:[%s8 + $0x20] sm:$0xff]
        %v698 = vld [vmem:[%s8 + $0x28] sm:$0xff]
        %v699 = vld [vmem:[%s8 + $0x30] sm:$0xff]
        %v700 = vld [vmem:[%s8 + $0x38] sm:$0xff]
        %v701 = vld [vmem:[%s8 + $0x40] sm:$0xff]
        %v702 = vld [vmem:[%s8 + $0x48] sm:$0xff]
        %v703 = vld [vmem:[%s8 + $0x50] sm:$0xff]
        %v704 = vld [vmem:[%s8 + $0x58] sm:$0xff]
        %v705 = vld [vmem:[%s8 + $0x60] sm:$0xff]
        %v706 = vld [vmem:[%s8 + $0x68] sm:$0xff]
        %v707 = vld [vmem:[%s8 + $0x70] sm:$0xff]
        %v708 = vld [vmem:[%s8 + $0x78] sm:$0xff]
        %v709 = vld [vmem:[%s9] sm:$0x1]
        %v711 = vperm.slane %v709, 0
        %713 = vmatpush.msra.mxu0 %v708
        %714 = vmatpush.msra.mxu0 %v707
        %715 = vmatpush.msra.mxu0 %v706
        %716 = vmatpush.msra.mxu0 %v705
        %717 = vmatpush.msra.mxu0 %v704
        %718 = vmatpush.msra.mxu0 %v703
        %719 = vmatpush.msra.mxu0 %v702
        %720 = vmatpush.msra.mxu0 %v701
        %721 = vmatpush.msra.mxu0 %v700
        %722 = vmatpush.msra.mxu0 %v699
        %723 = vmatpush.msra.mxu0 %v698
        %724 = vmatpush.msra.mxu0 %v697
        %725 = vmatpush.msra.mxu0 %v696
        %726 = vmatpush.msra.mxu0 %v695
        %727 = vmatpush.msra.mxu0 %v694
        %728 = vmatpush.msra.mxu0 %v693
        %729 = vmatmul.f32.gmra.mxu0 %v690
        %v730 = vpop.f32.mrf.mxu0
        %v731 = vadd.f32 %v711, %v730
        %732 = vdwg.mxu0
        %733 = vst [vmem:[%s506] sm:$0xff] %v731
        %s734 = sand.u32 %s258, 1
        %s735 = scalar_lea.sflag [#allocation3], %s734
        %s736 = sand.u32 %s258, 1
        %s737 = smul.addr %s736, 64
        %s738 = scalar_lea.vmem [#allocation2], %s737
        %s739 = sand.u32 %s35, 1
        %s740 = scalar_lea.sflag [#allocation5], %s739
        %s741 = sand.u32 %s284, 1
        %s742 = smul.addr %s741, 8
        %s743 = scalar_lea.vmem [#allocation4], %s742
        %s744 = sand.u32 %s35, 1
        %s745 = scalar_lea.sflag [#allocation5], %s744
        %s746 = sand.u32 %s310, 1
        %s747 = smul.addr %s746, 8
        %s748 = scalar_lea.vmem [#allocation6], %s747
        %s749 = sand.u32 %s336, 1
        %s750 = scalar_lea.sflag [#allocation8], %s749
        %s751 = sand.u32 %s336, 1
        %s752 = smul.addr %s751, 8
        %s753 = scalar_lea.vmem [#allocation7], %s752
        %p754 = scmp.lt.s32.totalorder %s35, 1
        %s755 = scalar_select %p754, %s35, 1
        %s756 = smul.addr %s755, 8
        %s757 = scalar_lea.vmem %s14, %s756
        // Predicated region
        $region61: #{textcnn_forward.1} parent=59 // pred_check
          %p758 = pneg %p268
        $region62: #{textcnn_forward.1} parent=59 // pred_check_branch
          %760 = sbr.rel (%p758) target = $region64
        $region63: #{textcnn_forward.1} parent=59 // pred_region
          %s761 = smul.u32 8, %s35
          %763 = vsyncadd %s735, 0
          %s764 = smul.addr %s761, 8
          %s765 = scalar_lea.hbm %s10, %s764
          %s766 = sshll.u32 %s738, 4
          %s767 = int_to_ptr.vmem [resolvable:$true] %s766
          %s768 = sshll.u32 %s765, 4
          %s769 = int_to_ptr.hbm [resolvable:$true] %s768
          %774 = dma.vmem_to_hbm [thread:$0]  %s767, 1024, %s769, %s735, 128, 128, 8
        $region64: #{textcnn_forward.1} parent=59 // pred_fallthru
          _
        // Predicated region
        $region65: #{textcnn_forward.1} parent=59 // pred_check
          %p775 = pneg %p294
        $region66: #{textcnn_forward.1} parent=59 // pred_check_branch
          %777 = sbr.rel (%p775) target = $region68
        $region67: #{textcnn_forward.1} parent=59 // pred_region
          %779 = vsyncadd %s740, 0
          %s780 = smul.addr %s35, 8
          %s781 = scalar_lea.hbm %s11, %s780
          %s783 = sshll.u32 %s743, 4
          %s784 = int_to_ptr.vmem [resolvable:$true] %s783
          %s785 = sshll.u32 %s781, 4
          %s786 = int_to_ptr.hbm [resolvable:$true] %s785
          %788 = dma.vmem_to_hbm [thread:$0]  %s784, 128, %s786, %s740
        $region68: #{textcnn_forward.1} parent=59 // pred_fallthru
          _
        // Predicated region
        $region69: #{textcnn_forward.1} parent=59 // pred_check
          %p789 = pneg %p320
        $region70: #{textcnn_forward.1} parent=59 // pred_check_branch
          %791 = sbr.rel (%p789) target = $region72
        $region71: #{textcnn_forward.1} parent=59 // pred_region
          %793 = vsyncadd %s745, 0
          %s794 = smul.addr %s35, 8
          %s795 = scalar_lea.hbm %s12, %s794
          %s797 = sshll.u32 %s748, 4
          %s798 = int_to_ptr.vmem [resolvable:$true] %s797
          %s799 = sshll.u32 %s795, 4
          %s800 = int_to_ptr.hbm [resolvable:$true] %s799
          %802 = dma.vmem_to_hbm [thread:$0]  %s798, 128, %s800, %s745
        $region72: #{textcnn_forward.1} parent=59 // pred_fallthru
          _
        // Predicated region
        $region73: #{textcnn_forward.1} parent=59 // pred_check
          %p803 = pneg %p346
        $region74: #{textcnn_forward.1} parent=59 // pred_check_branch
          %805 = sbr.rel (%p803) target = $region76
        $region75: #{textcnn_forward.1} parent=59 // pred_region
          %807 = vsyncadd %s750, 0
          %s808 = smul.addr %s35, 8
          %s809 = scalar_lea.hbm %s13, %s808
          %s811 = sshll.u32 %s753, 4
          %s812 = int_to_ptr.vmem [resolvable:$true] %s811
          %s813 = sshll.u32 %s809, 4
          %s814 = int_to_ptr.hbm [resolvable:$true] %s813
          %816 = dma.vmem_to_hbm [thread:$0]  %s812, 128, %s814, %s750
        $region76: #{textcnn_forward.1} parent=59 // pred_fallthru
          _
        // Predicated region
        $region77: #{textcnn_forward.1} parent=59 // pred_check
          %p817 = pneg %p372
        $region78: #{textcnn_forward.1} parent=59 // pred_check_branch
          %819 = sbr.rel (%p817) target = $region80
        $region79: #{textcnn_forward.1} parent=59 // pred_region
          _
        $region80: #{textcnn_forward.1} parent=59 // pred_fallthru
          _
      $region60: #{textcnn_forward.1} parent=5 // pred_fallthru
        _
      %p820 = scmp.le.s32.totalorder 2, %s30
      // Predicated region
      $region81: #{textcnn_forward.1} parent=5 // pred_check
        %p821 = pneg %p820
      $region82: #{textcnn_forward.1} parent=5 // pred_check_branch
        %823 = sbr.rel (%p821) target = $region84
      $region83: #{textcnn_forward.1} parent=5 // pred_region
        %s824 = ssub.s32 %s30, 2
        // Predicated region
        $region85: #{textcnn_forward.1} parent=83 // pred_check
          %p825 = pneg %p274
        $region86: #{textcnn_forward.1} parent=83 // pred_check_branch
          %827 = sbr.rel (%p825) target = $region88
        $region87: #{textcnn_forward.1} parent=83 // pred_region
          %s828 = sand.u32 %s259, 1
          %s829 = scalar_lea.sflag [#allocation3], %s828
          %s830 = sand.u32 %s259, 1
          %s831 = smul.addr %s830, 64
          %s832 = scalar_lea.vmem [#allocation2], %s831
          %834 = dma.done %s829, 1024
        $region88: #{textcnn_forward.1} parent=83 // pred_fallthru
          _
        // Predicated region
        $region89: #{textcnn_forward.1} parent=83 // pred_check
          %p835 = pneg %p300
        $region90: #{textcnn_forward.1} parent=83 // pred_check_branch
          %837 = sbr.rel (%p835) target = $region92
        $region91: #{textcnn_forward.1} parent=83 // pred_region
          %s838 = sand.u32 %s36, 1
          %s839 = scalar_lea.sflag [#allocation5], %s838
          %s840 = sand.u32 %s285, 1
          %s841 = smul.addr %s840, 8
          %s842 = scalar_lea.vmem [#allocation4], %s841
          %844 = dma.done %s839, 128
        $region92: #{textcnn_forward.1} parent=83 // pred_fallthru
          _
        // Predicated region
        $region93: #{textcnn_forward.1} parent=83 // pred_check
          %p845 = pneg %p326
        $region94: #{textcnn_forward.1} parent=83 // pred_check_branch
          %847 = sbr.rel (%p845) target = $region96
        $region95: #{textcnn_forward.1} parent=83 // pred_region
          %s848 = sand.u32 %s36, 1
          %s849 = scalar_lea.sflag [#allocation5], %s848
          %s850 = sand.u32 %s311, 1
          %s851 = smul.addr %s850, 8
          %s852 = scalar_lea.vmem [#allocation6], %s851
          %854 = dma.done %s849, 128
        $region96: #{textcnn_forward.1} parent=83 // pred_fallthru
          _
        // Predicated region
        $region97: #{textcnn_forward.1} parent=83 // pred_check
          %p855 = pneg %p352
        $region98: #{textcnn_forward.1} parent=83 // pred_check_branch
          %857 = sbr.rel (%p855) target = $region100
        $region99: #{textcnn_forward.1} parent=83 // pred_region
          %s858 = sand.u32 %s337, 1
          %s859 = scalar_lea.sflag [#allocation8], %s858
          %s860 = sand.u32 %s337, 1
          %s861 = smul.addr %s860, 8
          %s862 = scalar_lea.vmem [#allocation7], %s861
          %864 = dma.done %s859, 128
        $region100: #{textcnn_forward.1} parent=83 // pred_fallthru
          _
        // Predicated region
        $region101: #{textcnn_forward.1} parent=83 // pred_check
          %p865 = pneg %p378
        $region102: #{textcnn_forward.1} parent=83 // pred_check_branch
          %867 = sbr.rel (%p865) target = $region104
        $region103: #{textcnn_forward.1} parent=83 // pred_region
          %p868 = scmp.lt.s32.totalorder %s36, 1
          %s869 = scalar_select %p868, %s36, 1
          %s870 = smul.addr %s869, 8
          %s871 = scalar_lea.vmem %s14, %s870
        $region104: #{textcnn_forward.1} parent=83 // pred_fallthru
          _
      $region84: #{textcnn_forward.1} parent=5 // pred_fallthru
        _
    $region6: #{textcnn_forward.1} parent=1 // loop_footer
      %s34 = sadd.s32 1, %s30
    $region7: #{textcnn_forward.1} parent=1 // loop_footer_branch
      %29 = sbr.rel target = $region3
    $region8: #{textcnn_forward.1} parent=1 // loop_exit
      _
    %872 = vsyncpa [#allocation3], 1
    %s873 = scalar_lea.sflag [#allocation3], 1
    %874 = vsyncpa %s873, 1
    %875 = vsyncpa [#allocation5], 1
    %s876 = scalar_lea.sflag [#allocation5], 1
    %877 = vsyncpa %s876, 1
    %878 = vsyncpa [#allocation8], 1
    %s879 = scalar_lea.sflag [#allocation8], 1
    %880 = vsyncpa %s879, 1

</llo_original>
